<compile_context>
chip_gen: v5e
topology: v5e:2x2
jax: 0.10.0
libtpu: 0.0.40
codegen_flags: <defaults>
</compile_context>

<pallas_src>
import functools

import jax
import jax.numpy as jnp
from jax.experimental import pallas as pl
from jax.experimental.pallas import tpu as pltpu

LANE = 128             # lane width (last dim of every tile)
MAX_TILE_ROWS = 2048   # rows per grid step: 2048*128*4B = 1 MiB/input/buffer (f32)
NCORES = 2             # leading "parallel" grid axis; maps to the 2 TCs on v7x,
                       # runs sequentially (at most 1 cheap extra step) on v5e/v6e


def _bce_tile_loss(p_ref, t_ref):
    """Elementwise BCE on one (tile_rows, LANE) tile, computed in f32."""
    p = p_ref[...].astype(jnp.float32)
    t = t_ref[...].astype(jnp.float32)
    # torch.nn.BCELoss clamps the log terms at -100 for numerical stability.
    log_p = jnp.maximum(jnp.log(p), -100.0)
    log_1mp = jnp.maximum(jnp.log(1.0 - p), -100.0)
    return -(t * log_p + (1.0 - t) * log_1mp)


def _bce_sum_kernel(p_ref, t_ref, out_ref, *, rows, n_tiles):
    """Accumulate per-tile BCE into an (8, LANE) f32 output-resident accumulator."""
    tile_rows = p_ref.shape[0]
    c = pl.program_id(0)            # "core" axis (parallel)
    i = pl.program_id(1)            # streaming axis (arbitrary / reduction)

    @pl.when(i == 0)
    def _():
        out_ref[...] = jnp.zeros_like(out_ref)

    loss = _bce_tile_loss(p_ref, t_ref)

    # Rows past `rows` (ragged last block, or the clamped block a core with no
    # remaining work re-reads) must not contribute. Row-level compare only.
    start_row = (c * n_tiles + i) * tile_rows
    valid = rows - start_row        # traced int32 scalar

    @pl.when(valid >= tile_rows)    # fast path: fully valid tile, no mask
    def _():
        out_ref[...] += loss.reshape(tile_rows // 8, 8, LANE).sum(axis=0)

    @pl.when(valid < tile_rows)     # ragged / out-of-range tile
    def _():
        row = jax.lax.broadcasted_iota(jnp.int32, (tile_rows, LANE), 0)
        masked = jnp.where(row < valid, loss, 0.0)
        out_ref[...] += masked.reshape(tile_rows // 8, 8, LANE).sum(axis=0)


def _sublane_mult(dtype):
    # sublane multiple: 8 for 32-bit, 16 for 16-bit, 32 for 8-bit dtypes
    return max(8, 32 // jnp.dtype(dtype).itemsize)


def _bce_sum_ref(p, t):
    """Plain-JAX reference / tail path (same clamp semantics as torch BCELoss)."""
    p = p.astype(jnp.float32)
    t = t.astype(jnp.float32)
    lp = jnp.maximum(jnp.log(p), -100.0)
    l1p = jnp.maximum(jnp.log(1.0 - p), -100.0)
    return jnp.sum(-(t * lp + (1.0 - t) * l1p))


def bce_loss_sum(probs, target, mask=None):
    """TorchBCELoss(reduction='sum').forward — `probs` must be probabilities in (0, 1).

    `mask` is accepted for API parity with the torch module but (as there) unused.
    """
    del mask
    assert probs.shape == target.shape
    total = probs.size

    # No dtype upcast here: the kernel streams the native dtype (bf16/f16/f32)
    # straight from HBM and upcasts per-tile in VMEM.
    p_flat = probs.reshape(-1)
    t_flat = target.reshape(-1)

    mult = max(_sublane_mult(probs.dtype), _sublane_mult(target.dtype))
    chunk = mult * LANE                       # elements per full sublane group
    n_main = (total // chunk) * chunk         # kernel handles this aligned prefix
    rem = total - n_main                      # tiny (< mult*128) tail in plain JAX

    main_sum = jnp.float32(0.0)
    if n_main > 0:
        if rem:
            # Rare ragged case: kernel runs on the aligned prefix only
            # (no full-array jnp.pad copy).
            p_main, t_main = p_flat[:n_main], t_flat[:n_main]
        else:
            p_main, t_main = p_flat, t_flat   # pure no-copy reshape below

        rows = n_main // LANE                 # multiple of `mult` (and of 8)
        p2 = p_main.reshape(rows, LANE)
        t2 = t_main.reshape(rows, LANE)

        tile_rows = min(MAX_TILE_ROWS, rows)  # multiple of `mult` by construction
        n_blocks = pl.cdiv(rows, tile_rows)
        n_tiles = pl.cdiv(n_blocks, NCORES)   # blocks each core sweeps

        def in_map(c, i):
            # Clamp so a core with no remaining work re-reads the last valid
            # block; its contribution is masked to zero inside the kernel.
            return (jnp.minimum(c * n_tiles + i, n_blocks - 1), 0)

        out = pl.pallas_call(
            functools.partial(_bce_sum_kernel, rows=rows, n_tiles=n_tiles),
            out_shape=jax.ShapeDtypeStruct((NCORES, 8, LANE), jnp.float32),
            grid=(NCORES, n_tiles),
            in_specs=[
                pl.BlockSpec((tile_rows, LANE), in_map),
                pl.BlockSpec((tile_rows, LANE), in_map),
            ],
            out_specs=pl.BlockSpec((None, 8, LANE), lambda c, i: (c, 0, 0)),
            compiler_params=pltpu.CompilerParams(
                dimension_semantics=("parallel", "arbitrary"),
            ),
        )(p2, t2)
        main_sum = jnp.sum(out)               # add the two per-core partial slabs

    if rem:
        main_sum = main_sum + _bce_sum_ref(p_flat[n_main:], t_flat[n_main:])
    return main_sum


if __name__ == "__main__":
    key = jax.random.PRNGKey(0)
    k1, k2 = jax.random.split(key)

    # Primary example matching the module: NCHW probabilities + binary targets.
    shape = (2, 4, 16, 16)
    probs = jax.nn.sigmoid(jax.random.normal(k1, shape, dtype=jnp.float32))
    target = (jax.random.uniform(k2, shape) > 0.5).astype(jnp.float32)

    loss = jax.block_until_ready(bce_loss_sum(probs, target))
    ref = _bce_sum_ref(probs, target)
    assert jnp.allclose(loss, ref, rtol=1e-4, atol=1e-3), (loss, ref)

    # Extra coverage: multiple blocks, both partial-sum slabs doing real work.
    kk = jax.random.split(jax.random.PRNGKey(1), 2)
    shape2 = (8, 4, 128, 128)   # 524288 elems -> 4096 rows -> 2 blocks of 2048
    p2 = jax.nn.sigmoid(jax.random.normal(kk[0], shape2, dtype=jnp.float32))
    t2 = (jax.random.uniform(kk[1], shape2) > 0.5).astype(jnp.float32)
    l2 = jax.block_until_ready(bce_loss_sum(p2, t2))
    assert jnp.allclose(l2, _bce_sum_ref(p2, t2), rtol=1e-4), (l2, _bce_sum_ref(p2, t2))

    # Ragged total (not a multiple of 8*128): kernel prefix + tiny plain-JAX tail.
    kk = jax.random.split(jax.random.PRNGKey(2), 2)
    shape3 = (2, 3, 17, 13)     # 1326 elems
    p3 = jax.nn.sigmoid(jax.random.normal(kk[0], shape3, dtype=jnp.float32))
    t3 = (jax.random.uniform(kk[1], shape3) > 0.5).astype(jnp.float32)
    l3 = jax.block_until_ready(bce_loss_sum(p3, t3))
    assert jnp.allclose(l3, _bce_sum_ref(p3, t3), rtol=1e-4, atol=1e-3)

    # bf16 streamed natively (no wrapper-side upcast).
    kk = jax.random.split(jax.random.PRNGKey(3), 2)
    shape4 = (4, 8, 16, 16)
    p4 = jax.nn.sigmoid(jax.random.normal(kk[0], shape4, dtype=jnp.float32)).astype(jnp.bfloat16)
    t4 = (jax.random.uniform(kk[1], shape4) > 0.5).astype(jnp.bfloat16)
    l4 = jax.block_until_ready(bce_loss_sum(p4, t4))
    assert jnp.allclose(l4, _bce_sum_ref(p4, t4), rtol=1e-4, atol=1e-2)

    print("KERNEL_OK")
</pallas_src>

<mosaic_0001>
module attributes {stable_mosaic.version = 11 : i64} {
  func.func @_bce_sum_kernel(%arg0: i32, %arg1: i32, %arg2: memref<16x128xf32, #tpu.memory_space<vmem>>, %arg3: memref<16x128xf32, #tpu.memory_space<vmem>>, %arg4: memref<1x8x128xf32, #tpu.memory_space<vmem>>) attributes {dimension_semantics = [#tpu.dimension_semantics<parallel>, #tpu.dimension_semantics<arbitrary>], iteration_bounds = array<i64: 2, 1>, scalar_prefetch = 0 : i64, scratch_operands = 0 : i64, tpu.core_type = #tpu.core_type<tc>, window_params = [{transform_indices = @transform_0, window_bounds = array<i64: 16, 128>}, {transform_indices = @transform_1, window_bounds = array<i64: 16, 128>}, {transform_indices = @transform_2, window_bounds = array<i64: 1, 8, 128>}]} {
    %c0_i32 = arith.constant 0 : i32
    %0 = arith.cmpi eq, %arg1, %c0_i32 : i32
    %1 = arith.extui %0 : i1 to i32
    %c0_i32_0 = arith.constant 0 : i32
    %2 = arith.cmpi ne, %1, %c0_i32_0 : i32
    scf.if %2 {
      %cst_13 = arith.constant 0.000000e+00 : f32
      %30 = vector.broadcast %cst_13 : f32 to vector<8x128xf32>
      %c0_14 = arith.constant 0 : index
      %c0_15 = arith.constant 0 : index
      %c0_16 = arith.constant 0 : index
      %31 = vector.load %arg4[%c0_14, %c0_15, %c0_16] : memref<1x8x128xf32, #tpu.memory_space<vmem>>, vector<1x8x128xf32>
      %32 = vector.shape_cast %31 : vector<1x8x128xf32> to vector<8x128xf32>
      %33 = vector.shape_cast %30 : vector<8x128xf32> to vector<1x8x128xf32>
      tpu.vector_store %arg4[%c0_14, %c0_15, %c0_16], %33 {strides = array<i32>} : memref<1x8x128xf32, #tpu.memory_space<vmem>>, vector<1x8x128xf32>,
    } else {
    }
    %c0 = arith.constant 0 : index
    %c0_1 = arith.constant 0 : index
    %3 = vector.load %arg2[%c0, %c0_1] : memref<16x128xf32, #tpu.memory_space<vmem>>, vector<16x128xf32>
    %c0_2 = arith.constant 0 : index
    %c0_3 = arith.constant 0 : index
    %4 = vector.load %arg3[%c0_2, %c0_3] : memref<16x128xf32, #tpu.memory_space<vmem>>, vector<16x128xf32>
    %5 = math.log %3 : vector<16x128xf32>
    %cst = arith.constant -1.000000e+02 : f32
    %6 = vector.broadcast %cst : f32 to vector<16x128xf32>
    %7 = arith.maximumf %5, %6 : vector<16x128xf32>
    %cst_4 = arith.constant 1.000000e+00 : f32
    %8 = vector.broadcast %cst_4 : f32 to vector<16x128xf32>
    %9 = arith.subf %8, %3 : vector<16x128xf32>
    %10 = math.log %9 : vector<16x128xf32>
    %cst_5 = arith.constant -1.000000e+02 : f32
    %11 = vector.broadcast %cst_5 : f32 to vector<16x128xf32>
    %12 = arith.maximumf %10, %11 : vector<16x128xf32>
    %13 = arith.mulf %4, %7 : vector<16x128xf32>
    %cst_6 = arith.constant 1.000000e+00 : f32
    %14 = vector.broadcast %cst_6 : f32 to vector<16x128xf32>
    %15 = arith.subf %14, %4 : vector<16x128xf32>
    %16 = arith.mulf %15, %12 : vector<16x128xf32>
    %17 = arith.addf %13, %16 : vector<16x128xf32>
    %cst_7 = arith.constant 0.000000e+00 : f32
    %18 = vector.broadcast %cst_7 : f32 to vector<16x128xf32>
    %19 = arith.subf %18, %17 : vector<16x128xf32>
    %c1_i32 = arith.constant 1 : i32
    %20 = arith.muli %arg0, %c1_i32 : i32
    %21 = arith.addi %20, %arg1 : i32
    %c16_i32 = arith.constant 16 : i32
    %22 = arith.muli %21, %c16_i32 : i32
    %c16_i32_8 = arith.constant 16 : i32
    %23 = arith.subi %c16_i32_8, %22 : i32
    %c16_i32_9 = arith.constant 16 : i32
    %24 = arith.cmpi sge, %23, %c16_i32_9 : i32
    %25 = arith.extui %24 : i1 to i32
    %c0_i32_10 = arith.constant 0 : i32
    %26 = arith.cmpi ne, %25, %c0_i32_10 : i32
    scf.if %26 {
      %c0_13 = arith.constant 0 : index
      %c0_14 = arith.constant 0 : index
      %c0_15 = arith.constant 0 : index
      %30 = vector.load %arg4[%c0_13, %c0_14, %c0_15] : memref<1x8x128xf32, #tpu.memory_space<vmem>>, vector<1x8x128xf32>
      %31 = vector.shape_cast %30 : vector<1x8x128xf32> to vector<8x128xf32>
      %32 = vector.shape_cast %19 : vector<16x128xf32> to vector<2x8x128xf32>
      %cst_16 = arith.constant dense<0.000000e+00> : vector<8x128xf32>
      %33 = vector.multi_reduction <add>, %32, %cst_16 [0] : vector<2x8x128xf32> to vector<8x128xf32>
      %34 = arith.addf %31, %33 : vector<8x128xf32>
      %c0_17 = arith.constant 0 : index
      %c0_18 = arith.constant 0 : index
      %c0_19 = arith.constant 0 : index
      %35 = vector.load %arg4[%c0_17, %c0_18, %c0_19] : memref<1x8x128xf32, #tpu.memory_space<vmem>>, vector<1x8x128xf32>
      %36 = vector.shape_cast %35 : vector<1x8x128xf32> to vector<8x128xf32>
      %37 = vector.shape_cast %34 : vector<8x128xf32> to vector<1x8x128xf32>
      tpu.vector_store %arg4[%c0_17, %c0_18, %c0_19], %37 {strides = array<i32>} : memref<1x8x128xf32, #tpu.memory_space<vmem>>, vector<1x8x128xf32>,
    } else {
    }
    %c16_i32_11 = arith.constant 16 : i32
    %27 = arith.cmpi slt, %23, %c16_i32_11 : i32
    %28 = arith.extui %27 : i1 to i32
    %c0_i32_12 = arith.constant 0 : i32
    %29 = arith.cmpi ne, %28, %c0_i32_12 : i32
    scf.if %29 {
      %30 = tpu.iota {dimensions = array<i32: 0>} : vector<16x128xi32>
      %31 = vector.broadcast %23 : i32 to vector<16x128xi32>
      %32 = arith.cmpi slt, %30, %31 : vector<16x128xi32>
      %cst_13 = arith.constant 0.000000e+00 : f32
      %33 = vector.broadcast %cst_13 : f32 to vector<16x128xf32>
      %34 = arith.select %32, %19, %33 : vector<16x128xi1>, vector<16x128xf32>
      %c0_14 = arith.constant 0 : index
      %c0_15 = arith.constant 0 : index
      %c0_16 = arith.constant 0 : index
      %35 = vector.load %arg4[%c0_14, %c0_15, %c0_16] : memref<1x8x128xf32, #tpu.memory_space<vmem>>, vector<1x8x128xf32>
      %36 = vector.shape_cast %35 : vector<1x8x128xf32> to vector<8x128xf32>
      %37 = vector.shape_cast %34 : vector<16x128xf32> to vector<2x8x128xf32>
      %cst_17 = arith.constant dense<0.000000e+00> : vector<8x128xf32>
      %38 = vector.multi_reduction <add>, %37, %cst_17 [0] : vector<2x8x128xf32> to vector<8x128xf32>
      %39 = arith.addf %36, %38 : vector<8x128xf32>
      %c0_18 = arith.constant 0 : index
      %c0_19 = arith.constant 0 : index
      %c0_20 = arith.constant 0 : index
      %40 = vector.load %arg4[%c0_18, %c0_19, %c0_20] : memref<1x8x128xf32, #tpu.memory_space<vmem>>, vector<1x8x128xf32>
      %41 = vector.shape_cast %40 : vector<1x8x128xf32> to vector<8x128xf32>
      %42 = vector.shape_cast %39 : vector<8x128xf32> to vector<1x8x128xf32>
      tpu.vector_store %arg4[%c0_18, %c0_19, %c0_20], %42 {strides = array<i32>} : memref<1x8x128xf32, #tpu.memory_space<vmem>>, vector<1x8x128xf32>,
    } else {
    }
    return
  }
  func.func @transform_0(%arg0: i32, %arg1: i32) -> (i32, i32) {
    %c1_i32 = arith.constant 1 : i32
    %0 = arith.muli %arg0, %c1_i32 : i32
    %1 = arith.addi %0, %arg1 : i32
    %c0_i32 = arith.constant 0 : i32
    %2 = arith.minsi %1, %c0_i32 : i32
    %c0_i32_0 = arith.constant 0 : i32
    %c0_i32_1 = arith.constant 0 : i32
    return %2, %c0_i32_0 : i32, i32
  }
  func.func @transform_1(%arg0: i32, %arg1: i32) -> (i32, i32) {
    %c1_i32 = arith.constant 1 : i32
    %0 = arith.muli %arg0, %c1_i32 : i32
    %1 = arith.addi %0, %arg1 : i32
    %c0_i32 = arith.constant 0 : i32
    %2 = arith.minsi %1, %c0_i32 : i32
    %c0_i32_0 = arith.constant 0 : i32
    %c0_i32_1 = arith.constant 0 : i32
    return %2, %c0_i32_0 : i32, i32
  }
  func.func @transform_2(%arg0: i32, %arg1: i32) -> (i32, i32, i32) {
    %c0_i32 = arith.constant 0 : i32
    %c0_i32_0 = arith.constant 0 : i32
    %c0_i32_1 = arith.constant 0 : i32
    return %arg0, %c0_i32, %c0_i32_0 : i32, i32, i32
  }
}

</mosaic_0001>

<llo_original>
// kernel: tpu_custom_call.1
$region0: #{tpu_custom_call.1}
  #allocation0 [shape = 'u32[]', space=smem, size = 0x4, offset = 0x4, fixed_abs, tag = 'smem constant byte address 0x4 - core index']
  #allocation1 [shape = 'u32[72,128]{1,0:T(1,128)}', space=vmem, size = 0x9000, scoped, tag = 'internal scratch']
  %s0 = inlined_call_operand.hbm [shape: f32[16,128], index: 0, kind: input, shape index: {}]
  %s1 = inlined_call_operand.hbm [shape: f32[16,128], index: 1, kind: input, shape index: {}]
  %s2 = inlined_call_operand.hbm [shape: f32[2,8,128], index: 2, kind: output, shape index: {}]
  %s3 = sld [smem:[#allocation0]]
  $region61: #{tpu_custom_call.1} parent=0
    _
  %s5 = ssub.s32 1, %s3
  %s6 = scalar_select 0, %s5, %s3
  $region1: #{tpu_custom_call.1} parent=0
    #allocation2 [shape = 'u8[16384]{0}', space=vmem, size = 0x4000, scoped, tag = 'input window, operand 0']
    #allocation3 [shape = 's32[2]{0}', space=sflag, size = 0x8, scoped, tag = 'scoped memory for tpu_custom_call.1']
    #allocation4 [shape = 's32[2]{0}', space=sflag, size = 0x8, scoped, tag = 'scoped memory for tpu_custom_call.1']
    #allocation5 [shape = 'u8[16384]{0}', space=vmem, size = 0x4000, scoped, tag = 'input window, operand 1']
    #allocation6 [shape = 's32[2]{0}', space=sflag, size = 0x8, scoped, tag = 'scoped memory for tpu_custom_call.1']
    #allocation7 [shape = 'u8[8192]{0}', space=vmem, size = 0x2000, scoped, tag = 'output window, operand 0']
    %7 = vsyncpa [#allocation3], 0
    %s8 = scalar_lea.sflag [#allocation3], 1
    %9 = vsyncpa %s8, 0
    %10 = vsyncpa [#allocation6], 0
    %s11 = scalar_lea.sflag [#allocation6], 1
    %12 = vsyncpa %s11, 0
    %13 = vsyncpa [#allocation4], 0
    %s14 = scalar_lea.sflag [#allocation4], 1
    %15 = vsyncpa %s14, 0
    loop: start=0, step=1, limit=4
    $region2: #{tpu_custom_call.1} parent=1 // loop_pre_header
      _
    $region3: #{tpu_custom_call.1} parent=1 // loop_header
      %s17 = sphi 0, %s21
      %p18 = scmp.ge.s32.totalorder %s17, 4
      %s24 = sphi 0, %s36
      %s25 = sphi 0, %s32
      %s26 = sphi 0, %s24
      %s27 = sphi 0, %s25
      %s28 = sphi 0, %s26
      %s29 = sphi 0, %s27
      %s45 = sphi 0, %s47
      %s48 = sphi 0, %s45
      %s49 = sphi 0, %s48
      %s65 = sphi 0, %s49
      %s77 = sphi 0, %s79
      %s80 = sphi 0, %s77
      %s81 = sphi 0, %s80
      %s97 = sphi 0, %s81
      %s103 = sphi 0, %s105
      %s106 = sphi 0, %s103
      %s107 = sphi 0, %s106
      %s123 = sphi 0, %s107
    $region4: #{tpu_custom_call.1} parent=1 // loop_header_branch
      %20 = sbr.rel (%p18) target = $region8
    $region5: #{tpu_custom_call.1} parent=1 // loop_body
      %s22 = ssub.s32 %s17, 1
      %s23 = ssub.s32 %s17, 2
      %s30 = sadd.s32 1, %s25
      %p31 = scmp.ge.s32.totalorder %s30, 1
      %s32 = scalar_select %p31, 0, %s30
      %s33 = sadd.s32 1, %s24
      %s34 = scalar_select %p31, %s33, %s24
      %p35 = scmp.ge.s32.totalorder %s34, 2
      %s36 = scalar_select %p35, 0, %s34
      %s37 = sadd.s32 %s24, %s25
      %p38 = scmp.lt.s32.totalorder %s37, 0
      %s39 = scalar_select %p38, %s37, 0
      %s40 = sadd.s32 %s36, %s32
      %p41 = scmp.lt.s32.totalorder %s40, 0
      %s42 = scalar_select %p41, %s40, 0
      %s43 = ssub.s32 %s39, %s42
      %p44 = scmp.eq.s32.totalorder %s43, 0
      %s46 = sadd.s32 %s45, 1
      %s47 = scalar_select %p44, %s45, %s46
      %p50 = pneg %p44
      %p51 = scmp.eq.s32.totalorder %s17, 1
      %p52 = por %p50, %p51
      %p53 = scmp.ne.s32.totalorder %s45, %s48
      %p54 = scmp.eq.s32.totalorder %s17, 0
      %p55 = por %p53, %p54
      %p56 = scmp.ne.s32.totalorder %s45, %s48
      %p57 = scmp.eq.s32.totalorder %s22, 1
      %p58 = por %p56, %p57
      %p59 = scmp.ne.s32.totalorder %s48, %s49
      %p60 = scmp.eq.s32.totalorder %s22, 0
      %p61 = por %p59, %p60
      %p62 = scmp.ne.s32.totalorder %s48, %s49
      %p63 = scmp.eq.s32.totalorder %s23, 1
      %p64 = por %p62, %p63
      %p66 = scmp.ne.s32.totalorder %s49, %s65
      %p67 = scmp.eq.s32.totalorder %s23, 0
      %p68 = por %p66, %p67
      %s69 = sadd.s32 %s24, %s25
      %p70 = scmp.lt.s32.totalorder %s69, 0
      %s71 = scalar_select %p70, %s69, 0
      %s72 = sadd.s32 %s36, %s32
      %p73 = scmp.lt.s32.totalorder %s72, 0
      %s74 = scalar_select %p73, %s72, 0
      %s75 = ssub.s32 %s71, %s74
      %p76 = scmp.eq.s32.totalorder %s75, 0
      %s78 = sadd.s32 %s77, 1
      %s79 = scalar_select %p76, %s77, %s78
      %p82 = pneg %p76
      %p83 = scmp.eq.s32.totalorder %s17, 1
      %p84 = por %p82, %p83
      %p85 = scmp.ne.s32.totalorder %s77, %s80
      %p86 = scmp.eq.s32.totalorder %s17, 0
      %p87 = por %p85, %p86
      %p88 = scmp.ne.s32.totalorder %s77, %s80
      %p89 = scmp.eq.s32.totalorder %s22, 1
      %p90 = por %p88, %p89
      %p91 = scmp.ne.s32.totalorder %s80, %s81
      %p92 = scmp.eq.s32.totalorder %s22, 0
      %p93 = por %p91, %p92
      %p94 = scmp.ne.s32.totalorder %s80, %s81
      %p95 = scmp.eq.s32.totalorder %s23, 1
      %p96 = por %p94, %p95
      %p98 = scmp.ne.s32.totalorder %s81, %s97
      %p99 = scmp.eq.s32.totalorder %s23, 0
      %p100 = por %p98, %p99
      %s101 = ssub.s32 %s24, %s36
      %p102 = scmp.eq.s32.totalorder %s101, 0
      %s104 = sadd.s32 %s103, 1
      %s105 = scalar_select %p102, %s103, %s104
      %p108 = pneg %p102
      %p109 = scmp.eq.s32.totalorder %s17, 1
      %p110 = por %p108, %p109
      %p111 = scmp.ne.s32.totalorder %s103, %s106
      %p112 = scmp.eq.s32.totalorder %s17, 0
      %p113 = por %p111, %p112
      %p114 = scmp.ne.s32.totalorder %s103, %s106
      %p115 = scmp.eq.s32.totalorder %s22, 1
      %p116 = por %p114, %p115
      %p117 = scmp.ne.s32.totalorder %s106, %s107
      %p118 = scmp.eq.s32.totalorder %s22, 0
      %p119 = por %p117, %p118
      %p120 = scmp.ne.s32.totalorder %s106, %s107
      %p121 = scmp.eq.s32.totalorder %s23, 1
      %p122 = por %p120, %p121
      %p124 = scmp.ne.s32.totalorder %s107, %s123
      %p125 = scmp.eq.s32.totalorder %s23, 0
      %p126 = por %p124, %p125
      %p127 = scmp.le.s32.totalorder 1, %s17
      %p128 = scmp.lt.s32.totalorder %s17, 3
      %p129 = pnand %p127, %p128
      %p130 = pneg %p129
      // Predicated region
      $region9: #{tpu_custom_call.1} parent=5 // pred_check
        _
      $region10: #{tpu_custom_call.1} parent=5 // pred_check_branch
        %132 = sbr.rel (%p129) target = $region12
      $region11: #{tpu_custom_call.1} parent=5 // pred_region
        %s133 = ssub.s32 %s17, 1
      $region12: #{tpu_custom_call.1} parent=5 // pred_fallthru
        _
      %p134 = scmp.lt.s32.totalorder %s17, 2
      // Predicated region
      $region13: #{tpu_custom_call.1} parent=5 // pred_check
        %p135 = pneg %p134
      $region14: #{tpu_custom_call.1} parent=5 // pred_check_branch
        %137 = sbr.rel (%p135) target = $region16
      $region15: #{tpu_custom_call.1} parent=5 // pred_region
        // Predicated region
        $region17: #{tpu_custom_call.1} parent=15 // pred_check
          %p138 = pneg %p55
        $region18: #{tpu_custom_call.1} parent=15 // pred_check_branch
          %140 = sbr.rel (%p138) target = $region20
        $region19: #{tpu_custom_call.1} parent=15 // pred_region
          %s141 = sand.u32 %s45, 1
          %s142 = scalar_lea.sflag [#allocation3], %s141
          %s143 = sand.u32 %s45, 1
          %s144 = smul.addr %s143, 16
          %s145 = scalar_lea.vmem [#allocation2], %s144
          %s146 = sadd.s32 %s24, %s25
          %p147 = scmp.lt.s32.totalorder %s146, 0
          %s148 = scalar_select %p147, %s146, 0
          %s149 = smul.u32 2, %s148
          %151 = vsyncadd %s142, 0
          %s152 = smul.addr %s149, 8
          %s153 = scalar_lea.hbm %s0, %s152
          %s154 = sshll.u32 %s153, 4
          %s155 = int_to_ptr.hbm [resolvable:$true] %s154
          %s156 = sshll.u32 %s145, 4
          %s157 = int_to_ptr.vmem [resolvable:$true] %s156
          %162 = dma.hbm_to_vmem [thread:$0]  %s155, 256, %s157, %s142, 128, 128, 8
        $region20: #{tpu_custom_call.1} parent=15 // pred_fallthru
          _
        // Predicated region
        $region21: #{tpu_custom_call.1} parent=15 // pred_check
          %p163 = pneg %p87
        $region22: #{tpu_custom_call.1} parent=15 // pred_check_branch
          %165 = sbr.rel (%p163) target = $region24
        $region23: #{tpu_custom_call.1} parent=15 // pred_region
          %s166 = sand.u32 %s77, 1
          %s167 = scalar_lea.sflag [#allocation6], %s166
          %s168 = sand.u32 %s77, 1
          %s169 = smul.addr %s168, 16
          %s170 = scalar_lea.vmem [#allocation5], %s169
          %s171 = sadd.s32 %s24, %s25
          %p172 = scmp.lt.s32.totalorder %s171, 0
          %s173 = scalar_select %p172, %s171, 0
          %s174 = smul.u32 2, %s173
          %176 = vsyncadd %s167, 0
          %s177 = smul.addr %s174, 8
          %s178 = scalar_lea.hbm %s1, %s177
          %s179 = sshll.u32 %s178, 4
          %s180 = int_to_ptr.hbm [resolvable:$true] %s179
          %s181 = sshll.u32 %s170, 4
          %s182 = int_to_ptr.vmem [resolvable:$true] %s181
          %187 = dma.hbm_to_vmem [thread:$0]  %s180, 256, %s182, %s167, 128, 128, 8
        $region24: #{tpu_custom_call.1} parent=15 // pred_fallthru
          _
      $region16: #{tpu_custom_call.1} parent=5 // pred_fallthru
        _
      %p188 = scmp.le.s32.totalorder 1, %s17
      %p189 = scmp.lt.s32.totalorder %s17, 3
      %p190 = pnand %p188, %p189
      %p191 = pneg %p190
      // Predicated region
      $region25: #{tpu_custom_call.1} parent=5 // pred_check
        _
      $region26: #{tpu_custom_call.1} parent=5 // pred_check_branch
        %193 = sbr.rel (%p190) target = $region28
      $region27: #{tpu_custom_call.1} parent=5 // pred_region
        %s194 = ssub.s32 %s17, 1
        %s195 = sand.u32 %s48, 1
        %s196 = scalar_lea.sflag [#allocation3], %s195
        %s197 = sand.u32 %s48, 1
        %s198 = smul.addr %s197, 16
        %s199 = scalar_lea.vmem [#allocation2], %s198
        // Predicated region
        $region29: #{tpu_custom_call.1} parent=27 // pred_check
          %p200 = pneg %p61
        $region30: #{tpu_custom_call.1} parent=27 // pred_check_branch
          %202 = sbr.rel (%p200) target = $region32
        $region31: #{tpu_custom_call.1} parent=27 // pred_region
          %204 = dma.done %s196, 256
        $region32: #{tpu_custom_call.1} parent=27 // pred_fallthru
          _
        %s205 = sand.u32 %s80, 1
        %s206 = scalar_lea.sflag [#allocation6], %s205
        %s207 = sand.u32 %s80, 1
        %s208 = smul.addr %s207, 16
        %s209 = scalar_lea.vmem [#allocation5], %s208
        // Predicated region
        $region33: #{tpu_custom_call.1} parent=27 // pred_check
          %p210 = pneg %p93
        $region34: #{tpu_custom_call.1} parent=27 // pred_check_branch
          %212 = sbr.rel (%p210) target = $region36
        $region35: #{tpu_custom_call.1} parent=27 // pred_region
          %214 = dma.done %s206, 256
        $region36: #{tpu_custom_call.1} parent=27 // pred_fallthru
          _
        %s215 = sand.u32 %s48, 1
        %s216 = scalar_lea.sflag [#allocation3], %s215
        %s217 = sand.u32 %s48, 1
        %s218 = smul.addr %s217, 16
        %s219 = scalar_lea.vmem [#allocation2], %s218
        %p220 = pneg %p61
        %p221 = pneg %p58
        %s222 = sand.u32 %s80, 1
        %s223 = scalar_lea.sflag [#allocation6], %s222
        %s224 = sand.u32 %s80, 1
        %s225 = smul.addr %s224, 16
        %s226 = scalar_lea.vmem [#allocation5], %s225
        %p227 = pneg %p93
        %p228 = pneg %p90
        %p229 = pneg %p119
        %p230 = pneg %p116
        %s231 = sand.u32 %s106, 1
        %s232 = scalar_lea.sflag [#allocation4], %s231
        %s233 = sand.u32 %s106, 1
        %s234 = smul.addr %s233, 8
        %s235 = scalar_lea.vmem [#allocation7], %s234
        %s236 = sadd.s32 %s26, %s27
        %p237 = scmp.lt.s32.totalorder %s236, 0
        %s238 = scalar_select %p237, %s236, 0
        %s239 = smul.u32 2, %s238
        %s240 = sadd.s32 %s26, %s27
        %p241 = scmp.lt.s32.totalorder %s240, 0
        %s242 = scalar_select %p241, %s240, 0
        %s243 = smul.u32 2, %s242
        %p244 = scmp.eq.s32.totalorder %s27, 0
        // Predicated region
        $region37: #{tpu_custom_call.1} parent=27 // pred_check
          %p245 = pneg %p244
        $region38: #{tpu_custom_call.1} parent=27 // pred_check_branch
          %247 = sbr.rel (%p245) target = $region40
        $region39: #{tpu_custom_call.1} parent=27 // pred_region
          %248 = vst [vmem:[%s235] sm:$0xff] 0.0
        $region40: #{tpu_custom_call.1} parent=27 // pred_fallthru
          _
        %v249 = vld [vmem:[%s199] sm:$0xff]
        %v250 = vld [vmem:[%s199 + $0x8] sm:$0xff]
        %v251 = vld [vmem:[%s209] sm:$0xff]
        %v252 = vld [vmem:[%s209 + $0x8] sm:$0xff]
        %v253 = vlog2.pop %v249
        %v254 = vmul.f32 %v253, 0.6931472
        %v255 = vlog2.pop %v250
        %v256 = vmul.f32 %v255, 0.6931472
        %v257 = vmax.f32 %v254, -100.0
        %v258 = vmax.f32 %v256, -100.0
        %v259 = vsub.f32 1.0, %v249
        %v260 = vsub.f32 1.0, %v250
        %v261 = vlog2.pop %v259
        %v262 = vmul.f32 %v261, 0.6931472
        %v263 = vlog2.pop %v260
        %v264 = vmul.f32 %v263, 0.6931472
        %v265 = vmax.f32 %v262, -100.0
        %v266 = vmax.f32 %v264, -100.0
        %v267 = vmul.f32 %v251, %v257
        %v268 = vmul.f32 %v252, %v258
        %v269 = vsub.f32 1.0, %v251
        %v270 = vsub.f32 1.0, %v252
        %v271 = vmul.f32 %v269, %v265
        %v272 = vmul.f32 %v270, %v266
        %v273 = vadd.f32 %v267, %v271
        %v274 = vadd.f32 %v268, %v272
        %v275 = vsub.f32 0.0, %v273
        %v276 = vsub.f32 0.0, %v274
        %s277 = sadd.s32 %s26, %s27
        %s278 = smul.u32 %s277, 16
        %s279 = ssub.s32 16, %s278
        %p280 = scmp.ge.s32.totalorder %s279, 16
        // Predicated region
        $region41: #{tpu_custom_call.1} parent=27 // pred_check
          %p281 = pneg %p280
        $region42: #{tpu_custom_call.1} parent=27 // pred_check_branch
          %283 = sbr.rel (%p281) target = $region44
        $region43: #{tpu_custom_call.1} parent=27 // pred_region
          %v284 = vld [vmem:[%s235] sm:$0xff]
          %v285 = vadd.f32 %v275, %v276
          %v286 = vadd.f32 %v284, %v285
          %287 = vst [vmem:[%s235] sm:$0xff] %v286
        $region44: #{tpu_custom_call.1} parent=27 // pred_fallthru
          _
        %p288 = scmp.lt.s32.totalorder %s279, 16
        // Predicated region
        $region45: #{tpu_custom_call.1} parent=27 // pred_check
          %p289 = pneg %p288
        $region46: #{tpu_custom_call.1} parent=27 // pred_check_branch
          %291 = sbr.rel (%p289) target = $region48
        $region47: #{tpu_custom_call.1} parent=27 // pred_region
          %v292 = vlaneseq
          %v293 = vshrl.u32 %v292, 7
          %v294 = vadd.s32 %v293, 8
          %v295 = vstv %s279
          %vm296 = vcmp.lt.s32.totalorder %v293, %v295
          %vm297 = vcmp.lt.s32.totalorder %v294, %v295
          %v298 = vsel %vm296, %v275, 0.0
          %v299 = vsel %vm297, %v276, 0.0
          %v300 = vld [vmem:[%s235] sm:$0xff]
          %v301 = vadd.f32 %v298, %v299
          %v302 = vadd.f32 %v300, %v301
          %303 = vst [vmem:[%s235] sm:$0xff] %v302
        $region48: #{tpu_custom_call.1} parent=27 // pred_fallthru
          _
        %s304 = sand.u32 %s106, 1
        %s305 = scalar_lea.sflag [#allocation4], %s304
        %s306 = sand.u32 %s106, 1
        %s307 = smul.addr %s306, 8
        %s308 = scalar_lea.vmem [#allocation7], %s307
        // Predicated region
        $region49: #{tpu_custom_call.1} parent=27 // pred_check
          %p309 = pneg %p116
        $region50: #{tpu_custom_call.1} parent=27 // pred_check_branch
          %311 = sbr.rel (%p309) target = $region52
        $region51: #{tpu_custom_call.1} parent=27 // pred_region
          %313 = vsyncadd %s305, 0
          %s314 = smul.addr %s26, 8
          %s315 = scalar_lea.hbm %s2, %s314
          %s317 = sshll.u32 %s308, 4
          %s318 = int_to_ptr.vmem [resolvable:$true] %s317
          %s319 = sshll.u32 %s315, 4
          %s320 = int_to_ptr.hbm [resolvable:$true] %s319
          %322 = dma.vmem_to_hbm [thread:$0]  %s318, 128, %s320, %s305
        $region52: #{tpu_custom_call.1} parent=27 // pred_fallthru
          _
      $region28: #{tpu_custom_call.1} parent=5 // pred_fallthru
        _
      %p323 = scmp.le.s32.totalorder 2, %s17
      // Predicated region
      $region53: #{tpu_custom_call.1} parent=5 // pred_check
        %p324 = pneg %p323
      $region54: #{tpu_custom_call.1} parent=5 // pred_check_branch
        %326 = sbr.rel (%p324) target = $region56
      $region55: #{tpu_custom_call.1} parent=5 // pred_region
        %s327 = ssub.s32 %s17, 2
        // Predicated region
        $region57: #{tpu_custom_call.1} parent=55 // pred_check
          %p328 = pneg %p122
        $region58: #{tpu_custom_call.1} parent=55 // pred_check_branch
          %330 = sbr.rel (%p328) target = $region60
        $region59: #{tpu_custom_call.1} parent=55 // pred_region
          %s331 = sand.u32 %s107, 1
          %s332 = scalar_lea.sflag [#allocation4], %s331
          %s333 = sand.u32 %s107, 1
          %s334 = smul.addr %s333, 8
          %s335 = scalar_lea.vmem [#allocation7], %s334
          %337 = dma.done %s332, 128
        $region60: #{tpu_custom_call.1} parent=55 // pred_fallthru
          _
      $region56: #{tpu_custom_call.1} parent=5 // pred_fallthru
        _
    $region6: #{tpu_custom_call.1} parent=1 // loop_footer
      %s21 = sadd.s32 1, %s17
    $region7: #{tpu_custom_call.1} parent=1 // loop_footer_branch
      %16 = sbr.rel target = $region3
    $region8: #{tpu_custom_call.1} parent=1 // loop_exit
      _
    %338 = vsyncpa [#allocation3], 1
    %s339 = scalar_lea.sflag [#allocation3], 1
    %340 = vsyncpa %s339, 1
    %341 = vsyncpa [#allocation6], 1
    %s342 = scalar_lea.sflag [#allocation6], 1
    %343 = vsyncpa %s342, 1
    %344 = vsyncpa [#allocation4], 1
    %s345 = scalar_lea.sflag [#allocation4], 1
    %346 = vsyncpa %s345, 1

</llo_original>
